<compile_context>
chip_gen: v7x
topology: tpu7x:2x2x1
jax: 0.10.0
libtpu: 0.0.40
codegen_flags: <defaults>
</compile_context>

<pallas_src>
import math

import jax
import jax.numpy as jnp
from jax.experimental import pallas as pl
from jax.experimental.pallas import tpu as pltpu

HIDDEN = 1024   # hard-coded in the PyTorch module (lin1: feat_dim -> 1024)
LANE = 128      # TPU lane width


def _round_up(x, m):
    return ((x + m - 1) // m) * m


def _mlp_scene_kernel(feats_ref, w1_ref, b1_ref, w2_ref, b2_ref, out_ref, pool_ref):
    # feats_ref: (TB, TS, D) bf16   w1_ref: (D, 1024) bf16   b1_ref: (1, 1024) f32
    # w2_ref: (1024, Lp) bf16       b2_ref: (1, Lp) f32      out_ref: (TB, Lp) f32
    # pool_ref: (TB, D) f32 scratch -- running max over the S grid axis.
    s = pl.program_id(1)

    @pl.when(s == 0)
    def _init():
        pool_ref[...] = jnp.full_like(pool_ref, -jnp.inf)

    # Streamed max over this S tile (max in bf16 is exact; widen afterwards).
    tile_max = jnp.max(feats_ref[...], axis=1).astype(jnp.float32)   # (TB, D)
    pool_ref[...] = jnp.maximum(pool_ref[...], tile_max)

    @pl.when(s == pl.num_programs(1) - 1)
    def _finalize():
        pooled = pool_ref[...].astype(w1_ref.dtype)                  # (TB, D) bf16
        h = jnp.dot(pooled, w1_ref[...],
                    preferred_element_type=jnp.float32) + b1_ref[...]        # (TB, 1024) f32
        o = jnp.dot(h.astype(w2_ref.dtype), w2_ref[...],
                    preferred_element_type=jnp.float32) + b2_ref[...]        # (TB, Lp) f32
        out_ref[...] = o.astype(out_ref.dtype)


def mlp_scene_forward(feats, masks, params, *, compute_dtype=jnp.bfloat16):
    """JAX/Pallas equivalent of mlp_scene.forward.

    Args:
      feats: list; feats[1] is (B, S, feat_dim).
      masks: list; masks[1] is (B, S) -- unused (matches the PyTorch module).
      params: dict with w1 (D,1024), b1 (1,1024), w2 (1024,L), b2 (1,L), all f32.
      compute_dtype: matmul / DMA dtype for feats and weights (default bf16).

    Returns:
      [blank_char_out (0, L), scene_logits (B, L) float32]
    """
    del masks  # intentionally ignored, same as the PyTorch module
    scene_feat = feats[1]
    B, S, D = scene_feat.shape
    L = params["w2"].shape[1]
    hidden = params["w1"].shape[1]

    # ---- tiling & padding ----------------------------------------------------
    Lp = _round_up(max(L, 1), LANE)                 # lane-dense output width
    TB = min(256, _round_up(B, 8))                  # batch tile (multiple of 8)
    B_pad = _round_up(B, TB)
    TS = min(512, _round_up(S, 8))                  # sequence tile (multiple of 8)
    S_pad = _round_up(S, TS)

    x = scene_feat.astype(compute_dtype)
    if B_pad != B:                                  # pad batch rows with zeros
        x = jnp.pad(x, ((0, B_pad - B), (0, 0), (0, 0)))
    if S_pad != S:                                  # pad seq with -inf (max identity)
        x = jnp.pad(x, ((0, 0), (0, S_pad - S), (0, 0)),
                    constant_values=-jnp.inf)

    w1 = params["w1"].astype(compute_dtype)                          # (D, hidden)
    b1 = params["b1"].astype(jnp.float32)                            # (1, hidden)
    w2 = jnp.pad(params["w2"], ((0, 0), (0, Lp - L))).astype(compute_dtype)  # (hidden, Lp)
    b2 = jnp.pad(params["b2"], ((0, 0), (0, Lp - L))).astype(jnp.float32)    # (1, Lp)

    grid = (B_pad // TB, S_pad // TS)

    # ---- VMEM budget (double buffers) & cost estimate -------------------------
    cbytes = jnp.dtype(compute_dtype).itemsize
    vmem_est = (2 * TB * TS * D * cbytes                 # feats tile, double-buffered
                + 2 * D * hidden * cbytes                # w1 (resident)
                + 2 * hidden * Lp * cbytes               # w2 (resident)
                + 2 * (hidden + Lp) * 4                  # biases
                + 2 * TB * Lp * 4                        # output tile
                + TB * max(D, LANE) * 4)                 # pool scratch
    vmem_limit = min(max(int(vmem_est * 1.5) + (4 << 20), 16 << 20), 64 << 20)

    cost = pl.CostEstimate(
        flops=2 * B_pad * (D * hidden + hidden * Lp),
        transcendentals=0,
        bytes_accessed=(x.size * cbytes + w1.size * cbytes + w2.size * cbytes
                        + B_pad * Lp * 4),
    )

    out_padded = pl.pallas_call(
        _mlp_scene_kernel,
        out_shape=jax.ShapeDtypeStruct((B_pad, Lp), jnp.float32),
        grid=grid,
        in_specs=[
            pl.BlockSpec((TB, TS, D), lambda i, s: (i, s, 0)),       # feats tiles
            pl.BlockSpec((D, hidden), lambda i, s: (0, 0)),          # w1 resident
            pl.BlockSpec((1, hidden), lambda i, s: (0, 0)),          # b1 resident
            pl.BlockSpec((hidden, Lp), lambda i, s: (0, 0)),         # w2 resident
            pl.BlockSpec((1, Lp), lambda i, s: (0, 0)),              # b2 resident
        ],
        out_specs=pl.BlockSpec((TB, Lp), lambda i, s: (i, 0)),
        scratch_shapes=[pltpu.VMEM((TB, D), jnp.float32)],
        compiler_params=pltpu.CompilerParams(
            dimension_semantics=("parallel", "arbitrary"),
            vmem_limit_bytes=vmem_limit,
        ),
        cost_estimate=cost,
    )(x, w1, b1, w2, b2)

    out = out_padded[:B, :L]
    blank_char_out = jnp.zeros((0, L), dtype=jnp.float32)
    return [blank_char_out, out]


def init_params(key, feat_dim, num_labels):
    """Deterministic nn.Linear-style init (uniform +/- 1/sqrt(fan_in)), f32."""
    k1, k2, k3, k4 = jax.random.split(key, 4)
    bound1 = 1.0 / math.sqrt(feat_dim)
    bound2 = 1.0 / math.sqrt(HIDDEN)
    return {
        # stored pre-transposed: (in_dim, out_dim)
        "w1": jax.random.uniform(k1, (feat_dim, HIDDEN), jnp.float32, -bound1, bound1),
        "b1": jax.random.uniform(k2, (1, HIDDEN), jnp.float32, -bound1, bound1),
        "w2": jax.random.uniform(k3, (HIDDEN, num_labels), jnp.float32, -bound2, bound2),
        "b2": jax.random.uniform(k4, (1, num_labels), jnp.float32, -bound2, bound2),
    }


if __name__ == "__main__":
    key = jax.random.PRNGKey(0)
    k_feat0, k_feat1, k_params = jax.random.split(key, 3)

    batch, seq, feat_dim, num_labels = 2, 8, 32, 4

    # feats[0] (character-level features) is unused by the module's forward;
    # feats[1] is the scene feature actually consumed.
    feats = [
        jax.random.normal(k_feat0, (batch, seq, feat_dim), jnp.float32),
        jax.random.normal(k_feat1, (batch, seq, feat_dim), jnp.float32),
    ]
    masks = [
        jnp.ones((batch, seq), jnp.float32),
        jnp.ones((batch, seq), jnp.float32),
    ]

    params = init_params(k_params, feat_dim, num_labels)

    char_out, scene_out = mlp_scene_forward(feats, masks, params)
    jax.block_until_ready(scene_out)

    # Reference check in plain JAX using the same bf16 compute path as the kernel.
    xb = feats[1].astype(jnp.bfloat16)
    pooled_ref = jnp.max(xb, axis=1)                                   # (B, D) bf16
    h_ref = jnp.dot(pooled_ref, params["w1"].astype(jnp.bfloat16),
                    preferred_element_type=jnp.float32) + params["b1"]
    ref = jnp.dot(h_ref.astype(jnp.bfloat16), params["w2"].astype(jnp.bfloat16),
                  preferred_element_type=jnp.float32) + params["b2"]

    assert char_out.shape == (0, num_labels)
    assert scene_out.shape == (batch, num_labels)
    assert jnp.allclose(scene_out, ref, atol=1e-2, rtol=1e-2), (
        f"max abs diff = {jnp.max(jnp.abs(scene_out - ref))}")

    print("KERNEL_OK")
</pallas_src>

<mosaic_0001>
module attributes {stable_mosaic.version = 11 : i64} {
  func.func @_mlp_scene_kernel(%arg0: i32, %arg1: i32, %arg2: memref<8x8x32xbf16, #tpu.memory_space<vmem>>, %arg3: memref<32x1024xbf16, #tpu.memory_space<vmem>>, %arg4: memref<1x1024xf32, #tpu.memory_space<vmem>>, %arg5: memref<1024x128xbf16, #tpu.memory_space<vmem>>, %arg6: memref<1x128xf32, #tpu.memory_space<vmem>>, %arg7: memref<8x128xf32, #tpu.memory_space<vmem>>, %arg8: memref<8x32xf32, #tpu.memory_space<vmem>>) attributes {dimension_semantics = [#tpu.dimension_semantics<parallel>, #tpu.dimension_semantics<arbitrary>], iteration_bounds = array<i64: 1, 1>, scalar_prefetch = 0 : i64, scratch_operands = 1 : i64, tpu.core_type = #tpu.core_type<tc>, window_params = [{transform_indices = @transform_0, window_bounds = array<i64: 8, 8, 32>}, {pipeline_mode = #tpu.pipeline_mode<synchronous>, transform_indices = @transform_1, window_bounds = array<i64: 32, 1024>}, {pipeline_mode = #tpu.pipeline_mode<synchronous>, transform_indices = @transform_2, window_bounds = array<i64: 1, 1024>}, {pipeline_mode = #tpu.pipeline_mode<synchronous>, transform_indices = @transform_3, window_bounds = array<i64: 1024, 128>}, {pipeline_mode = #tpu.pipeline_mode<synchronous>, transform_indices = @transform_4, window_bounds = array<i64: 1, 128>}, {transform_indices = @transform_5, window_bounds = array<i64: 8, 128>}]} {
    %c0_i32 = arith.constant 0 : i32
    %0 = arith.cmpi eq, %arg1, %c0_i32 : i32
    %1 = arith.extui %0 : i1 to i32
    %c0_i32_0 = arith.constant 0 : i32
    %2 = arith.cmpi ne, %1, %c0_i32_0 : i32
    scf.if %2 {
      %cst_9 = arith.constant 0xFF800000 : f32
      %12 = vector.broadcast %cst_9 : f32 to vector<8x32xf32>
      %c0_10 = arith.constant 0 : index
      %c0_11 = arith.constant 0 : index
      %13 = vector.load %arg8[%c0_10, %c0_11] : memref<8x32xf32, #tpu.memory_space<vmem>>, vector<8x32xf32>
      tpu.vector_store %arg8[%c0_10, %c0_11], %12 {strides = array<i32>} : memref<8x32xf32, #tpu.memory_space<vmem>>, vector<8x32xf32>,
    } else {
    }
    %c0 = arith.constant 0 : index
    %c0_1 = arith.constant 0 : index
    %c0_2 = arith.constant 0 : index
    %3 = vector.load %arg2[%c0, %c0_1, %c0_2] : memref<8x8x32xbf16, #tpu.memory_space<vmem>>, vector<8x8x32xbf16>
    %cst = arith.constant dense<0xFF80> : vector<8x32xbf16>
    %4 = vector.multi_reduction <maximumf>, %3, %cst [1] : vector<8x8x32xbf16> to vector<8x32xbf16>
    %5 = arith.extf %4 : vector<8x32xbf16> to vector<8x32xf32>
    %c0_3 = arith.constant 0 : index
    %c0_4 = arith.constant 0 : index
    %6 = vector.load %arg8[%c0_3, %c0_4] : memref<8x32xf32, #tpu.memory_space<vmem>>, vector<8x32xf32>
    %7 = arith.maximumf %6, %5 : vector<8x32xf32>
    %c0_5 = arith.constant 0 : index
    %c0_6 = arith.constant 0 : index
    %8 = vector.load %arg8[%c0_5, %c0_6] : memref<8x32xf32, #tpu.memory_space<vmem>>, vector<8x32xf32>
    tpu.vector_store %arg8[%c0_5, %c0_6], %7 {strides = array<i32>} : memref<8x32xf32, #tpu.memory_space<vmem>>, vector<8x32xf32>,
    %c0_i32_7 = arith.constant 0 : i32
    %9 = arith.cmpi eq, %arg1, %c0_i32_7 : i32
    %10 = arith.extui %9 : i1 to i32
    %c0_i32_8 = arith.constant 0 : i32
    %11 = arith.cmpi ne, %10, %c0_i32_8 : i32
    scf.if %11 {
      %c0_9 = arith.constant 0 : index
      %c0_10 = arith.constant 0 : index
      %12 = vector.load %arg8[%c0_9, %c0_10] : memref<8x32xf32, #tpu.memory_space<vmem>>, vector<8x32xf32>
      %13 = arith.truncf %12 : vector<8x32xf32> to vector<8x32xbf16>
      %c0_11 = arith.constant 0 : index
      %c0_12 = arith.constant 0 : index
      %14 = vector.load %arg3[%c0_11, %c0_12] : memref<32x1024xbf16, #tpu.memory_space<vmem>>, vector<32x1024xbf16>
      %cst_13 = arith.constant dense<0.000000e+00> : vector<8x1024xf32>
      %15 = tpu.matmul %13, %14, %cst_13 {dimension_numbers = #tpu.dot_dimension_numbers<[1], [0], [0], [1], [0, 0, 1, 1], [], []>} : vector<8x32xbf16>, vector<32x1024xbf16>, vector<8x1024xf32> -> vector<8x1024xf32>
      %c0_14 = arith.constant 0 : index
      %c0_15 = arith.constant 0 : index
      %16 = vector.load %arg4[%c0_14, %c0_15] : memref<1x1024xf32, #tpu.memory_space<vmem>>, vector<1x1024xf32>
      %17 = vector.broadcast %16 : vector<1x1024xf32> to vector<8x1024xf32>
      %18 = arith.addf %15, %17 : vector<8x1024xf32>
      %19 = arith.truncf %18 : vector<8x1024xf32> to vector<8x1024xbf16>
      %c0_16 = arith.constant 0 : index
      %c0_17 = arith.constant 0 : index
      %20 = vector.load %arg5[%c0_16, %c0_17] : memref<1024x128xbf16, #tpu.memory_space<vmem>>, vector<1024x128xbf16>
      %cst_18 = arith.constant dense<0.000000e+00> : vector<8x128xf32>
      %21 = tpu.matmul %19, %20, %cst_18 {dimension_numbers = #tpu.dot_dimension_numbers<[1], [0], [0], [1], [0, 0, 1, 1], [], []>} : vector<8x1024xbf16>, vector<1024x128xbf16>, vector<8x128xf32> -> vector<8x128xf32>
      %c0_19 = arith.constant 0 : index
      %c0_20 = arith.constant 0 : index
      %22 = vector.load %arg6[%c0_19, %c0_20] : memref<1x128xf32, #tpu.memory_space<vmem>>, vector<1x128xf32>
      %23 = vector.broadcast %22 : vector<1x128xf32> to vector<8x128xf32>
      %24 = arith.addf %21, %23 : vector<8x128xf32>
      %c0_21 = arith.constant 0 : index
      %c0_22 = arith.constant 0 : index
      %25 = vector.load %arg7[%c0_21, %c0_22] : memref<8x128xf32, #tpu.memory_space<vmem>>, vector<8x128xf32>
      tpu.vector_store %arg7[%c0_21, %c0_22], %24 {strides = array<i32>} : memref<8x128xf32, #tpu.memory_space<vmem>>, vector<8x128xf32>,
    } else {
    }
    return
  }
  func.func @transform_0(%arg0: i32, %arg1: i32) -> (i32, i32, i32) {
    %c0_i32 = arith.constant 0 : i32
    %c0_i32_0 = arith.constant 0 : i32
    return %arg0, %arg1, %c0_i32 : i32, i32, i32
  }
  func.func @transform_1(%arg0: i32, %arg1: i32) -> (i32, i32) {
    %c0_i32 = arith.constant 0 : i32
    %c0_i32_0 = arith.constant 0 : i32
    %c0_i32_1 = arith.constant 0 : i32
    return %c0_i32, %c0_i32_0 : i32, i32
  }
  func.func @transform_2(%arg0: i32, %arg1: i32) -> (i32, i32) {
    %c0_i32 = arith.constant 0 : i32
    %c0_i32_0 = arith.constant 0 : i32
    %c0_i32_1 = arith.constant 0 : i32
    return %c0_i32, %c0_i32_0 : i32, i32
  }
  func.func @transform_3(%arg0: i32, %arg1: i32) -> (i32, i32) {
    %c0_i32 = arith.constant 0 : i32
    %c0_i32_0 = arith.constant 0 : i32
    %c0_i32_1 = arith.constant 0 : i32
    return %c0_i32, %c0_i32_0 : i32, i32
  }
  func.func @transform_4(%arg0: i32, %arg1: i32) -> (i32, i32) {
    %c0_i32 = arith.constant 0 : i32
    %c0_i32_0 = arith.constant 0 : i32
    %c0_i32_1 = arith.constant 0 : i32
    return %c0_i32, %c0_i32_0 : i32, i32
  }
  func.func @transform_5(%arg0: i32, %arg1: i32) -> (i32, i32) {
    %c0_i32 = arith.constant 0 : i32
    %c0_i32_0 = arith.constant 0 : i32
    return %arg0, %c0_i32 : i32, i32
  }
}

</mosaic_0001>

<llo_original>
// kernel: tpu_custom_call.1
$region0: #{tpu_custom_call.1}
  #allocation0 [shape = 'u32[]', space=smem, size = 0x4, offset = 0x4, fixed_abs, tag = 'smem constant byte address 0x4 - core index']
  #allocation1 [shape = 'u32[144,128]{1,0:T(1,128)}', space=vmem, size = 0x12000, scoped, tag = 'internal scratch']
  #allocation2 [shape = 'f32[8,32]{1,0:T(8,128)}', space=vmem, size = 0x1000, scoped, tag = 'scratch operand']
  %s0 = inlined_call_operand.hbm [shape: bf16[8,8,32], index: 0, kind: input, shape index: {}]
  %s1 = inlined_call_operand.hbm [shape: bf16[32,1024], index: 1, kind: input, shape index: {}]
  %s2 = inlined_call_operand.hbm [shape: f32[1,1024], index: 2, kind: input, shape index: {}]
  %s3 = inlined_call_operand.hbm [shape: bf16[1024,128], index: 3, kind: input, shape index: {}]
  %s4 = inlined_call_operand.vmem [shape: f32[1,128], index: 4, kind: input, shape index: {}]
  %s5 = inlined_call_operand.hbm [shape: f32[8,128], index: 5, kind: output, shape index: {}]
  %s6 = sld [smem:[#allocation0]]
  $region54: #{tpu_custom_call.1} parent=0
    _
  %s8 = ssub.s32 1, %s6
  %s9 = scalar_select 0, %s8, %s6
  $region1: #{tpu_custom_call.1} parent=0
    #allocation3 [shape = 'u8[16384]{0}', space=vmem, size = 0x4000, scoped, tag = 'input window, operand 0, single buffered']
    #allocation4 [shape = 's32[1]{0}', space=sflag, size = 0x4, scoped, tag = 'scoped memory for tpu_custom_call.1']
    #allocation5 [shape = 's32[1]{0}', space=sflag, size = 0x4, scoped, tag = 'scoped memory for tpu_custom_call.1']
    #allocation6 [shape = 'u8[65536]{0}', space=vmem, size = 0x10000, scoped, tag = 'input window, operand 1, single buffered']
    #allocation7 [shape = 's32[1]{0}', space=sflag, size = 0x4, scoped, tag = 'scoped memory for tpu_custom_call.1']
    #allocation8 [shape = 'u8[4096]{0}', space=vmem, size = 0x1000, scoped, tag = 'input window, operand 2, single buffered']
    #allocation9 [shape = 'u8[262144]{0}', space=vmem, size = 0x40000, scoped, tag = 'input window, operand 3, single buffered']
    #allocation10 [shape = 's32[1]{0}', space=sflag, size = 0x4, scoped, tag = 'scoped memory for tpu_custom_call.1']
    #allocation11 [shape = 'u8[4096]{0}', space=vmem, size = 0x1000, scoped, tag = 'output window, operand 0, single buffered']
    %10 = vsyncpa [#allocation4], 0
    %11 = vsyncpa [#allocation7], 0
    %12 = vsyncpa [#allocation10], 0
    %13 = vsyncpa [#allocation5], 0
    // Predicated region
    $region2: #{tpu_custom_call.1} parent=1 // pred_check
      _
    $region3: #{tpu_custom_call.1} parent=1 // pred_check_branch
      %15 = sbr.rel (0) target = $region5
    $region4: #{tpu_custom_call.1} parent=1 // pred_region
      %s17 = ssub.s32 512, 512
      %18 = vsyncadd [#allocation4], %s17
      %s19 = sshll.u32 [#allocation3], 4
      %s20 = int_to_ptr.vmem [resolvable:$true] %s19
      %25 = dma.hbm_to_vmem [thread:$0]  %s0, 512, %s20, [#allocation4], 64, 64, 4
    $region5: #{tpu_custom_call.1} parent=1 // pred_fallthru
      _
    // Predicated region
    $region6: #{tpu_custom_call.1} parent=1 // pred_check
      _
    $region7: #{tpu_custom_call.1} parent=1 // pred_check_branch
      %27 = sbr.rel (0) target = $region9
    $region8: #{tpu_custom_call.1} parent=1 // pred_region
      %s29 = ssub.s32 2048, 2048
      %30 = vsyncadd [#allocation7], %s29
      %s31 = sshll.u32 [#allocation6], 4
      %s32 = int_to_ptr.vmem [resolvable:$true] %s31
      %37 = dma.hbm_to_vmem [thread:$0]  %s1, 2048, %s32, [#allocation7], 512, 512, 32
    $region9: #{tpu_custom_call.1} parent=1 // pred_fallthru
      _
    // Predicated region
    $region10: #{tpu_custom_call.1} parent=1 // pred_check
      _
    $region11: #{tpu_custom_call.1} parent=1 // pred_check_branch
      %39 = sbr.rel (0) target = $region13
    $region12: #{tpu_custom_call.1} parent=1 // pred_region
      %s41 = ssub.s32 128, 128
      %42 = vsyncadd [#allocation7], %s41
      %s44 = sshll.u32 [#allocation8], 4
      %s45 = int_to_ptr.vmem [resolvable:$true] %s44
      %47 = dma.hbm_to_vmem [thread:$0]  %s2, 128, %s45, [#allocation7]
    $region13: #{tpu_custom_call.1} parent=1 // pred_fallthru
      _
    // Predicated region
    $region14: #{tpu_custom_call.1} parent=1 // pred_check
      _
    $region15: #{tpu_custom_call.1} parent=1 // pred_check_branch
      %49 = sbr.rel (0) target = $region17
    $region16: #{tpu_custom_call.1} parent=1 // pred_region
      %s51 = ssub.s32 8192, 8192
      %52 = vsyncadd [#allocation10], %s51
      %s53 = sshll.u32 [#allocation9], 4
      %s54 = int_to_ptr.vmem [resolvable:$true] %s53
      %59 = dma.hbm_to_vmem [thread:$0]  %s3, 8192, %s54, [#allocation10], 64, 64, 4
    $region17: #{tpu_custom_call.1} parent=1 // pred_fallthru
      _
    // Predicated region
    $region18: #{tpu_custom_call.1} parent=1 // pred_check
      _
    $region19: #{tpu_custom_call.1} parent=1 // pred_check_branch
      %61 = sbr.rel (0) target = $region21
    $region20: #{tpu_custom_call.1} parent=1 // pred_region
      _
    $region21: #{tpu_custom_call.1} parent=1 // pred_fallthru
      _
    // Predicated region
    $region22: #{tpu_custom_call.1} parent=1 // pred_check
      _
    $region23: #{tpu_custom_call.1} parent=1 // pred_check_branch
      %63 = sbr.rel (0) target = $region25
    $region24: #{tpu_custom_call.1} parent=1 // pred_region
      %64 = dma.done [#allocation4], 512
    $region25: #{tpu_custom_call.1} parent=1 // pred_fallthru
      _
    // Predicated region
    $region26: #{tpu_custom_call.1} parent=1 // pred_check
      _
    $region27: #{tpu_custom_call.1} parent=1 // pred_check_branch
      %66 = sbr.rel (0) target = $region29
    $region28: #{tpu_custom_call.1} parent=1 // pred_region
      %67 = dma.done [#allocation7], 2048
    $region29: #{tpu_custom_call.1} parent=1 // pred_fallthru
      _
    // Predicated region
    $region30: #{tpu_custom_call.1} parent=1 // pred_check
      _
    $region31: #{tpu_custom_call.1} parent=1 // pred_check_branch
      %69 = sbr.rel (0) target = $region33
    $region32: #{tpu_custom_call.1} parent=1 // pred_region
      %70 = dma.done [#allocation7], 128
    $region33: #{tpu_custom_call.1} parent=1 // pred_fallthru
      _
    // Predicated region
    $region34: #{tpu_custom_call.1} parent=1 // pred_check
      _
    $region35: #{tpu_custom_call.1} parent=1 // pred_check_branch
      %72 = sbr.rel (0) target = $region37
    $region36: #{tpu_custom_call.1} parent=1 // pred_region
      %73 = dma.done [#allocation10], 8192
    $region37: #{tpu_custom_call.1} parent=1 // pred_fallthru
      _
    %p76 = scmp.eq.s32.totalorder 0, 0
    // Predicated region
    $region38: #{tpu_custom_call.1} parent=1 // pred_check
      %p77 = pneg %p76
    $region39: #{tpu_custom_call.1} parent=1 // pred_check_branch
      %79 = sbr.rel (%p77) target = $region41
    $region40: #{tpu_custom_call.1} parent=1 // pred_region
      %vm80 = vcmask 261120
      %81 = vst.msk [vmem:[#allocation2] sm:$0xff] %vm80, -inf
    $region41: #{tpu_custom_call.1} parent=1 // pred_fallthru
      _
    %v82 = vld [vmem:[#allocation3] sm:$0xf]
    %v83 = vld [vmem:[#allocation3 + $0x4] sm:$0xf]
    %v84 = vld [vmem:[#allocation3 + $0x8] sm:$0xf]
    %v85 = vld [vmem:[#allocation3 + $0xc] sm:$0xf]
    %v86 = vld [vmem:[#allocation3 + $0x10] sm:$0xf]
    %v87 = vld [vmem:[#allocation3 + $0x14] sm:$0xf]
    %v88 = vld [vmem:[#allocation3 + $0x18] sm:$0xf]
    %v89 = vld [vmem:[#allocation3 + $0x1c] sm:$0xf]
    %vm90 = vcmask 257024
    %v93 = vsel %vm90, %v82, 4286644096
    %v95 = vunpack.i.l.bf16 %v93
    %v96 = vunpack.i.h.bf16 %v93
    %v97 = vmax.f32 %v95, %v96
    %v98 = vrot.slane %v97, 4
    %v99 = vmax.f32 %v97, %v98
    %v100 = vrot.slane %v99, 2
    %v101 = vmax.f32 %v99, %v100
    %v102 = vrot.slane %v101, 1
    %v103 = vmax.f32 %v101, %v102
    %v104 = vpack.i.bf16 %v103, %v103
    %v106 = vsel %vm90, %v83, 4286644096
    %v108 = vunpack.i.l.bf16 %v106
    %v109 = vunpack.i.h.bf16 %v106
    %v110 = vmax.f32 %v108, %v109
    %v111 = vrot.slane %v110, 4
    %v112 = vmax.f32 %v110, %v111
    %v113 = vrot.slane %v112, 2
    %v114 = vmax.f32 %v112, %v113
    %v115 = vrot.slane %v114, 1
    %v116 = vmax.f32 %v114, %v115
    %v117 = vpack.i.bf16 %v116, %v116
    %v119 = vsel %vm90, %v84, 4286644096
    %v121 = vunpack.i.l.bf16 %v119
    %v122 = vunpack.i.h.bf16 %v119
    %v123 = vmax.f32 %v121, %v122
    %v124 = vrot.slane %v123, 4
    %v125 = vmax.f32 %v123, %v124
    %v126 = vrot.slane %v125, 2
    %v127 = vmax.f32 %v125, %v126
    %v128 = vrot.slane %v127, 1
    %v129 = vmax.f32 %v127, %v128
    %v130 = vpack.i.bf16 %v129, %v129
    %v132 = vsel %vm90, %v85, 4286644096
    %v134 = vunpack.i.l.bf16 %v132
    %v135 = vunpack.i.h.bf16 %v132
    %v136 = vmax.f32 %v134, %v135
    %v137 = vrot.slane %v136, 4
    %v138 = vmax.f32 %v136, %v137
    %v139 = vrot.slane %v138, 2
    %v140 = vmax.f32 %v138, %v139
    %v141 = vrot.slane %v140, 1
    %v142 = vmax.f32 %v140, %v141
    %v143 = vpack.i.bf16 %v142, %v142
    %v145 = vsel %vm90, %v86, 4286644096
    %v147 = vunpack.i.l.bf16 %v145
    %v148 = vunpack.i.h.bf16 %v145
    %v149 = vmax.f32 %v147, %v148
    %v150 = vrot.slane %v149, 4
    %v151 = vmax.f32 %v149, %v150
    %v152 = vrot.slane %v151, 2
    %v153 = vmax.f32 %v151, %v152
    %v154 = vrot.slane %v153, 1
    %v155 = vmax.f32 %v153, %v154
    %v156 = vpack.i.bf16 %v155, %v155
    %v158 = vsel %vm90, %v87, 4286644096
    %v160 = vunpack.i.l.bf16 %v158
    %v161 = vunpack.i.h.bf16 %v158
    %v162 = vmax.f32 %v160, %v161
    %v163 = vrot.slane %v162, 4
    %v164 = vmax.f32 %v162, %v163
    %v165 = vrot.slane %v164, 2
    %v166 = vmax.f32 %v164, %v165
    %v167 = vrot.slane %v166, 1
    %v168 = vmax.f32 %v166, %v167
    %v169 = vpack.i.bf16 %v168, %v168
    %v171 = vsel %vm90, %v88, 4286644096
    %v173 = vunpack.i.l.bf16 %v171
    %v174 = vunpack.i.h.bf16 %v171
    %v175 = vmax.f32 %v173, %v174
    %v176 = vrot.slane %v175, 4
    %v177 = vmax.f32 %v175, %v176
    %v178 = vrot.slane %v177, 2
    %v179 = vmax.f32 %v177, %v178
    %v180 = vrot.slane %v179, 1
    %v181 = vmax.f32 %v179, %v180
    %v182 = vpack.i.bf16 %v181, %v181
    %v184 = vsel %vm90, %v89, 4286644096
    %v186 = vunpack.i.l.bf16 %v184
    %v187 = vunpack.i.h.bf16 %v184
    %v188 = vmax.f32 %v186, %v187
    %v189 = vrot.slane %v188, 4
    %v190 = vmax.f32 %v188, %v189
    %v191 = vrot.slane %v190, 2
    %v192 = vmax.f32 %v190, %v191
    %v193 = vrot.slane %v192, 1
    %v194 = vmax.f32 %v192, %v193
    %v195 = vpack.i.bf16 %v194, %v194
    %v196 = vunpack.c.l.bf16 %v104
    %v197 = vunpack.c.l.bf16 %v117
    %v198 = vunpack.c.l.bf16 %v130
    %v199 = vunpack.c.l.bf16 %v143
    %v200 = vunpack.c.l.bf16 %v156
    %v201 = vunpack.c.l.bf16 %v169
    %v202 = vunpack.c.l.bf16 %v182
    %v203 = vunpack.c.l.bf16 %v195
    %v204 = vld [vmem:[#allocation2] sm:$0xff]
    %vm213 = vcmask 1041409
    %v214 = vsel %vm213, %v197, %v196
    %vm215 = vcmask 1042434
    %v216 = vsel %vm215, %v198, %v214
    %vm217 = vcmask 1043459
    %v218 = vsel %vm217, %v199, %v216
    %vm219 = vcmask 1044484
    %v220 = vsel %vm219, %v200, %v218
    %vm221 = vcmask 1045509
    %v222 = vsel %vm221, %v201, %v220
    %vm223 = vcmask 1046534
    %v224 = vsel %vm223, %v202, %v222
    %vm225 = vcmask 1047559
    %v226 = vsel %vm225, %v203, %v224
    %v228 = vmax.f32 %v204, %v226
    %vm229 = vcmask 261120
    %230 = vst.msk [vmem:[#allocation2] sm:$0xff] %vm229, %v228
    // Predicated region
    $region42: #{tpu_custom_call.1} parent=1 // pred_check
      %p231 = pneg %p76
    $region43: #{tpu_custom_call.1} parent=1 // pred_check_branch
      %233 = sbr.rel (%p231) target = $region45
    $region44: #{tpu_custom_call.1} parent=1 // pred_region
      %v234 = vld [vmem:[#allocation2] sm:$0xff]
      %v235 = vpack.c.bf16 %v234, %v234
      %v236 = vld [vmem:[#allocation6] sm:$0xff]
      %v237 = vld [vmem:[#allocation6 + $0x8] sm:$0xff]
      %v238 = vld [vmem:[#allocation6 + $0x10] sm:$0xff]
      %v239 = vld [vmem:[#allocation6 + $0x18] sm:$0xff]
      %v240 = vld [vmem:[#allocation6 + $0x20] sm:$0xff]
      %v241 = vld [vmem:[#allocation6 + $0x28] sm:$0xff]
      %v242 = vld [vmem:[#allocation6 + $0x30] sm:$0xff]
      %v243 = vld [vmem:[#allocation6 + $0x38] sm:$0xff]
      %v244 = vld [vmem:[#allocation6 + $0x40] sm:$0xff]
      %v245 = vld [vmem:[#allocation6 + $0x48] sm:$0xff]
      %v246 = vld [vmem:[#allocation6 + $0x50] sm:$0xff]
      %v247 = vld [vmem:[#allocation6 + $0x58] sm:$0xff]
      %v248 = vld [vmem:[#allocation6 + $0x60] sm:$0xff]
      %v249 = vld [vmem:[#allocation6 + $0x68] sm:$0xff]
      %v250 = vld [vmem:[#allocation6 + $0x70] sm:$0xff]
      %v251 = vld [vmem:[#allocation6 + $0x78] sm:$0xff]
      %v252 = vld [vmem:[#allocation8] sm:$0xff]
      %v254 = vlaneseq
      %v255 = vshrl.u32 %v254, 7
      %v256 = vsub.s32 0, %v255
      %v257 = vrot.slane %v252, %v256
      %v258 = vlaneseq
      %v259 = vshrl.u32 %v258, 7
      %v260 = vsub.s32 1, %v259
      %v261 = vrot.slane %v252, %v260
      %v262 = vlaneseq
      %v263 = vshrl.u32 %v262, 7
      %v264 = vsub.s32 2, %v263
      %v265 = vrot.slane %v252, %v264
      %v266 = vlaneseq
      %v267 = vshrl.u32 %v266, 7
      %v268 = vsub.s32 3, %v267
      %v269 = vrot.slane %v252, %v268
      %v270 = vlaneseq
      %v271 = vshrl.u32 %v270, 7
      %v272 = vsub.s32 4, %v271
      %v273 = vrot.slane %v252, %v272
      %v274 = vlaneseq
      %v275 = vshrl.u32 %v274, 7
      %v276 = vsub.s32 5, %v275
      %v277 = vrot.slane %v252, %v276
      %v278 = vlaneseq
      %v279 = vshrl.u32 %v278, 7
      %v280 = vsub.s32 6, %v279
      %v281 = vrot.slane %v252, %v280
      %v282 = vlaneseq
      %v283 = vshrl.u32 %v282, 7
      %v284 = vsub.s32 7, %v283
      %v285 = vrot.slane %v252, %v284
      %v310 = vunpack.c.l.b16 %v236
      %v311 = vunpack.c.h.b16 %v236
      %v312 = vunpack.c.l.b16 %v237
      %v313 = vunpack.c.h.b16 %v237
      %v314 = vunpack.c.l.b16 %v238
      %v315 = vunpack.c.h.b16 %v238
      %v316 = vunpack.c.l.b16 %v239
      %v317 = vunpack.c.h.b16 %v239
      %v318 = vunpack.c.l.b16 %v240
      %v319 = vunpack.c.h.b16 %v240
      %v320 = vunpack.c.l.b16 %v241
      %v321 = vunpack.c.h.b16 %v241
      %v322 = vunpack.c.l.b16 %v242
      %v323 = vunpack.c.h.b16 %v242
      %v324 = vunpack.c.l.b16 %v243
      %v325 = vunpack.c.h.b16 %v243
      %v326 = vunpack.c.l.b16 %v244
      %v327 = vunpack.c.h.b16 %v244
      %v328 = vunpack.c.l.b16 %v245
      %v329 = vunpack.c.h.b16 %v245
      %v330 = vunpack.c.l.b16 %v246
      %v331 = vunpack.c.h.b16 %v246
      %v332 = vunpack.c.l.b16 %v247
      %v333 = vunpack.c.h.b16 %v247
      %v334 = vunpack.c.l.b16 %v248
      %v335 = vunpack.c.h.b16 %v248
      %v336 = vunpack.c.l.b16 %v249
      %v337 = vunpack.c.h.b16 %v249
      %v338 = vunpack.c.l.b16 %v250
      %v339 = vunpack.c.h.b16 %v250
      %v340 = vunpack.c.l.b16 %v251
      %v341 = vunpack.c.h.b16 %v251
      %v342 = vpack.c.b16 %v318, %v310
      %v343 = vpack.c.b16 %v319, %v311
      %v344 = vpack.c.b16 %v320, %v312
      %v345 = vpack.c.b16 %v321, %v313
      %v346 = vpack.c.b16 %v322, %v314
      %v347 = vpack.c.b16 %v323, %v315
      %v348 = vpack.c.b16 %v324, %v316
      %v349 = vpack.c.b16 %v325, %v317
      %v350 = vpack.c.b16 %v334, %v326
      %v351 = vpack.c.b16 %v335, %v327
      %v352 = vpack.c.b16 %v336, %v328
      %v353 = vpack.c.b16 %v337, %v329
      %v354 = vpack.c.b16 %v338, %v330
      %v355 = vpack.c.b16 %v339, %v331
      %v356 = vpack.c.b16 %v340, %v332
      %v357 = vpack.c.b16 %v341, %v333
      %v375 = vsel %vm229, %v235, 0
      %377 = vmatprep.subr.bf16.mxu0 %v343
      %378 = vmatpush1.bf16.msra.mxu0 %v342
      %379 = vmatprep.subr.bf16.mxu0 %v351
      %380 = vmatpush1.bf16.msra.mxu0 %v350
      %381 = vmatprep.subr.bf16.mxu0 0
      %382 = vmatpush1.bf16.msra.mxu0 0
      %383 = vmatprep.subr.bf16.mxu0 0
      %384 = vmatpush1.bf16.msra.mxu0 0
      %385 = vmatprep.subr.bf16.mxu0 0
      %386 = vmatpush1.bf16.msra.mxu0 0
      %387 = vmatprep.subr.bf16.mxu0 0
      %388 = vmatpush1.bf16.msra.mxu0 0
      %389 = vmatprep.subr.bf16.mxu0 0
      %390 = vmatpush1.bf16.msra.mxu0 0
      %391 = vmatprep.subr.bf16.mxu0 0
      %392 = vmatpush1.bf16.msra.mxu0 0
      %393 = vmatprep.subr.bf16.mxu0 0
      %394 = vmatpush1.bf16.msra.mxu0 0
      %395 = vmatprep.subr.bf16.mxu0 0
      %396 = vmatpush1.bf16.msra.mxu0 0
      %397 = vmatprep.subr.bf16.mxu0 0
      %398 = vmatpush1.bf16.msra.mxu0 0
      %399 = vmatprep.subr.bf16.mxu0 0
      %400 = vmatpush1.bf16.msra.mxu0 0
      %401 = vmatprep.subr.bf16.mxu0 0
      %402 = vmatpush1.bf16.msra.mxu0 0
      %403 = vmatprep.subr.bf16.mxu0 0
      %404 = vmatpush1.bf16.msra.mxu0 0
      %405 = vmatprep.subr.bf16.mxu0 0
      %406 = vmatpush1.bf16.msra.mxu0 0
      %407 = vmatprep.subr.bf16.mxu0 0
      %408 = vmatpush1.bf16.msra.mxu0 0
      %409 = vmatprep.mubr.bf16.mxu0 0
      %410 = vmatmul.mubr.bf16.gmra.mrb[0].mxu0 %v375
      %v411 = vpop.f32.mrb[0].mxu0
      %v412 = vadd.f32 %v257, %v411
      %v413 = vpop.f32.mrb[0].mxu0
      %v414 = vadd.f32 %v261, %v413
      %v415 = vpop.f32.mrb[0].mxu0
      %v416 = vpop.f32.mrb[0].mxu0
      %417 = vdwg.mxu0
      %418 = vmatprep.subr.bf16.mxu0 %v345
      %419 = vmatpush1.bf16.msra.mxu0 %v344
      %420 = vmatprep.subr.bf16.mxu0 %v353
      %421 = vmatpush1.bf16.msra.mxu0 %v352
      %422 = vmatprep.subr.bf16.mxu0 0
      %423 = vmatpush1.bf16.msra.mxu0 0
      %424 = vmatprep.subr.bf16.mxu0 0
      %425 = vmatpush1.bf16.msra.mxu0 0
      %426 = vmatprep.subr.bf16.mxu0 0
      %427 = vmatpush1.bf16.msra.mxu0 0
      %428 = vmatprep.subr.bf16.mxu0 0
      %429 = vmatpush1.bf16.msra.mxu0 0
      %430 = vmatprep.subr.bf16.mxu0 0
      %431 = vmatpush1.bf16.msra.mxu0 0
      %432 = vmatprep.subr.bf16.mxu0 0
      %433 = vmatpush1.bf16.msra.mxu0 0
      %434 = vmatprep.subr.bf16.mxu0 0
      %435 = vmatpush1.bf16.msra.mxu0 0
      %436 = vmatprep.subr.bf16.mxu0 0
      %437 = vmatpush1.bf16.msra.mxu0 0
      %438 = vmatprep.subr.bf16.mxu0 0
      %439 = vmatpush1.bf16.msra.mxu0 0
      %440 = vmatprep.subr.bf16.mxu0 0
      %441 = vmatpush1.bf16.msra.mxu0 0
      %442 = vmatprep.subr.bf16.mxu0 0
      %443 = vmatpush1.bf16.msra.mxu0 0
      %444 = vmatprep.subr.bf16.mxu0 0
      %445 = vmatpush1.bf16.msra.mxu0 0
      %446 = vmatprep.subr.bf16.mxu0 0
      %447 = vmatpush1.bf16.msra.mxu0 0
      %448 = vmatprep.subr.bf16.mxu0 0
      %449 = vmatpush1.bf16.msra.mxu0 0
      %450 = vmatprep.mubr.bf16.mxu0 0
      %451 = vmatmul.mubr.bf16.gmra.mrb[0].mxu0 %v375
      %v452 = vpop.f32.mrb[0].mxu0
      %v453 = vadd.f32 %v265, %v452
      %v454 = vpop.f32.mrb[0].mxu0
      %v455 = vadd.f32 %v269, %v454
      %v456 = vpop.f32.mrb[0].mxu0
      %v457 = vpop.f32.mrb[0].mxu0
      %458 = vdwg.mxu0
      %459 = vmatprep.subr.bf16.mxu0 %v347
      %460 = vmatpush1.bf16.msra.mxu0 %v346
      %461 = vmatprep.subr.bf16.mxu0 %v355
      %462 = vmatpush1.bf16.msra.mxu0 %v354
      %463 = vmatprep.subr.bf16.mxu0 0
      %464 = vmatpush1.bf16.msra.mxu0 0
      %465 = vmatprep.subr.bf16.mxu0 0
      %466 = vmatpush1.bf16.msra.mxu0 0
      %467 = vmatprep.subr.bf16.mxu0 0
      %468 = vmatpush1.bf16.msra.mxu0 0
      %469 = vmatprep.subr.bf16.mxu0 0
      %470 = vmatpush1.bf16.msra.mxu0 0
      %471 = vmatprep.subr.bf16.mxu0 0
      %472 = vmatpush1.bf16.msra.mxu0 0
      %473 = vmatprep.subr.bf16.mxu0 0
      %474 = vmatpush1.bf16.msra.mxu0 0
      %475 = vmatprep.subr.bf16.mxu0 0
      %476 = vmatpush1.bf16.msra.mxu0 0
      %477 = vmatprep.subr.bf16.mxu0 0
      %478 = vmatpush1.bf16.msra.mxu0 0
      %479 = vmatprep.subr.bf16.mxu0 0
      %480 = vmatpush1.bf16.msra.mxu0 0
      %481 = vmatprep.subr.bf16.mxu0 0
      %482 = vmatpush1.bf16.msra.mxu0 0
      %483 = vmatprep.subr.bf16.mxu0 0
      %484 = vmatpush1.bf16.msra.mxu0 0
      %485 = vmatprep.subr.bf16.mxu0 0
      %486 = vmatpush1.bf16.msra.mxu0 0
      %487 = vmatprep.subr.bf16.mxu0 0
      %488 = vmatpush1.bf16.msra.mxu0 0
      %489 = vmatprep.subr.bf16.mxu0 0
      %490 = vmatpush1.bf16.msra.mxu0 0
      %491 = vmatprep.mubr.bf16.mxu0 0
      %492 = vmatmul.mubr.bf16.gmra.mrb[0].mxu0 %v375
      %v493 = vpop.f32.mrb[0].mxu0
      %v494 = vadd.f32 %v273, %v493
      %v495 = vpop.f32.mrb[0].mxu0
      %v496 = vadd.f32 %v277, %v495
      %v497 = vpop.f32.mrb[0].mxu0
      %v498 = vpop.f32.mrb[0].mxu0
      %499 = vdwg.mxu0
      %500 = vmatprep.subr.bf16.mxu0 %v349
      %501 = vmatpush1.bf16.msra.mxu0 %v348
      %502 = vmatprep.subr.bf16.mxu0 %v357
      %503 = vmatpush1.bf16.msra.mxu0 %v356
      %504 = vmatprep.subr.bf16.mxu0 0
      %505 = vmatpush1.bf16.msra.mxu0 0
      %506 = vmatprep.subr.bf16.mxu0 0
      %507 = vmatpush1.bf16.msra.mxu0 0
      %508 = vmatprep.subr.bf16.mxu0 0
      %509 = vmatpush1.bf16.msra.mxu0 0
      %510 = vmatprep.subr.bf16.mxu0 0
      %511 = vmatpush1.bf16.msra.mxu0 0
      %512 = vmatprep.subr.bf16.mxu0 0
      %513 = vmatpush1.bf16.msra.mxu0 0
      %514 = vmatprep.subr.bf16.mxu0 0
      %515 = vmatpush1.bf16.msra.mxu0 0
      %516 = vmatprep.subr.bf16.mxu0 0
      %517 = vmatpush1.bf16.msra.mxu0 0
      %518 = vmatprep.subr.bf16.mxu0 0
      %519 = vmatpush1.bf16.msra.mxu0 0
      %520 = vmatprep.subr.bf16.mxu0 0
      %521 = vmatpush1.bf16.msra.mxu0 0
      %522 = vmatprep.subr.bf16.mxu0 0
      %523 = vmatpush1.bf16.msra.mxu0 0
      %524 = vmatprep.subr.bf16.mxu0 0
      %525 = vmatpush1.bf16.msra.mxu0 0
      %526 = vmatprep.subr.bf16.mxu0 0
      %527 = vmatpush1.bf16.msra.mxu0 0
      %528 = vmatprep.subr.bf16.mxu0 0
      %529 = vmatpush1.bf16.msra.mxu0 0
      %530 = vmatprep.subr.bf16.mxu0 0
      %531 = vmatpush1.bf16.msra.mxu0 0
      %532 = vmatprep.mubr.bf16.mxu0 0
      %533 = vmatmul.mubr.bf16.gmra.mrb[0].mxu0 %v375
      %v534 = vpop.f32.mrb[0].mxu0
      %v535 = vadd.f32 %v281, %v534
      %v536 = vpop.f32.mrb[0].mxu0
      %v537 = vadd.f32 %v285, %v536
      %v538 = vpop.f32.mrb[0].mxu0
      %v539 = vpop.f32.mrb[0].mxu0
      %540 = vdwg.mxu0
      %v541 = vpack.c.bf16 %v412, %v412
      %v542 = vpack.c.bf16 %v414, %v414
      %v543 = vpack.c.bf16 %v453, %v453
      %v544 = vpack.c.bf16 %v455, %v455
      %v545 = vpack.c.bf16 %v494, %v494
      %v546 = vpack.c.bf16 %v496, %v496
      %v547 = vpack.c.bf16 %v535, %v535
      %v548 = vpack.c.bf16 %v537, %v537
      %v549 = vld [vmem:[#allocation9] sm:$0xf]
      %v550 = vld [vmem:[#allocation9 + $0x4] sm:$0xf]
      %v551 = vld [vmem:[#allocation9 + $0x8] sm:$0xf]
      %v552 = vld [vmem:[#allocation9 + $0xc] sm:$0xf]
      %v553 = vld [vmem:[#allocation9 + $0x10] sm:$0xf]
      %v554 = vld [vmem:[#allocation9 + $0x14] sm:$0xf]
      %v555 = vld [vmem:[#allocation9 + $0x18] sm:$0xf]
      %v556 = vld [vmem:[#allocation9 + $0x1c] sm:$0xf]
      %v557 = vld [vmem:[#allocation9 + $0x20] sm:$0xf]
      %v558 = vld [vmem:[#allocation9 + $0x24] sm:$0xf]
      %v559 = vld [vmem:[#allocation9 + $0x28] sm:$0xf]
      %v560 = vld [vmem:[#allocation9 + $0x2c] sm:$0xf]
      %v561 = vld [vmem:[#allocation9 + $0x30] sm:$0xf]
      %v562 = vld [vmem:[#allocation9 + $0x34] sm:$0xf]
      %v563 = vld [vmem:[#allocation9 + $0x38] sm:$0xf]
      %v564 = vld [vmem:[#allocation9 + $0x3c] sm:$0xf]
      %v565 = vld [vmem:[#allocation9 + $0x40] sm:$0xf]
      %v566 = vld [vmem:[#allocation9 + $0x44] sm:$0xf]
      %v567 = vld [vmem:[#allocation9 + $0x48] sm:$0xf]
      %v568 = vld [vmem:[#allocation9 + $0x4c] sm:$0xf]
      %v569 = vld [vmem:[#allocation9 + $0x50] sm:$0xf]
      %v570 = vld [vmem:[#allocation9 + $0x54] sm:$0xf]
      %v571 = vld [vmem:[#allocation9 + $0x58] sm:$0xf]
      %v572 = vld [vmem:[#allocation9 + $0x5c] sm:$0xf]
      %v573 = vld [vmem:[#allocation9 + $0x60] sm:$0xf]
      %v574 = vld [vmem:[#allocation9 + $0x64] sm:$0xf]
      %v575 = vld [vmem:[#allocation9 + $0x68] sm:$0xf]
      %v576 = vld [vmem:[#allocation9 + $0x6c] sm:$0xf]
      %v577 = vld [vmem:[#allocation9 + $0x70] sm:$0xf]
      %v578 = vld [vmem:[#allocation9 + $0x74] sm:$0xf]
      %v579 = vld [vmem:[#allocation9 + $0x78] sm:$0xf]
      %v580 = vld [vmem:[#allocation9 + $0x7c] sm:$0xf]
      %v581 = vld [vmem:[#allocation9 + $0x80] sm:$0xf]
      %v582 = vld [vmem:[#allocation9 + $0x84] sm:$0xf]
      %v583 = vld [vmem:[#allocation9 + $0x88] sm:$0xf]
      %v584 = vld [vmem:[#allocation9 + $0x8c] sm:$0xf]
      %v585 = vld [vmem:[#allocation9 + $0x90] sm:$0xf]
      %v586 = vld [vmem:[#allocation9 + $0x94] sm:$0xf]
      %v587 = vld [vmem:[#allocation9 + $0x98] sm:$0xf]
      %v588 = vld [vmem:[#allocation9 + $0x9c] sm:$0xf]
      %v589 = vld [vmem:[#allocation9 + $0xa0] sm:$0xf]
      %v590 = vld [vmem:[#allocation9 + $0xa4] sm:$0xf]
      %v591 = vld [vmem:[#allocation9 + $0xa8] sm:$0xf]
      %v592 = vld [vmem:[#allocation9 + $0xac] sm:$0xf]
      %v593 = vld [vmem:[#allocation9 + $0xb0] sm:$0xf]
      %v594 = vld [vmem:[#allocation9 + $0xb4] sm:$0xf]
      %v595 = vld [vmem:[#allocation9 + $0xb8] sm:$0xf]
      %v596 = vld [vmem:[#allocation9 + $0xbc] sm:$0xf]
      %v597 = vld [vmem:[#allocation9 + $0xc0] sm:$0xf]
      %v598 = vld [vmem:[#allocation9 + $0xc4] sm:$0xf]
      %v599 = vld [vmem:[#allocation9 + $0xc8] sm:$0xf]
      %v600 = vld [vmem:[#allocation9 + $0xcc] sm:$0xf]
      %v601 = vld [vmem:[#allocation9 + $0xd0] sm:$0xf]
      %v602 = vld [vmem:[#allocation9 + $0xd4] sm:$0xf]
      %v603 = vld [vmem:[#allocation9 + $0xd8] sm:$0xf]
      %v604 = vld [vmem:[#allocation9 + $0xdc] sm:$0xf]
      %v605 = vld [vmem:[#allocation9 + $0xe0] sm:$0xf]
      %v606 = vld [vmem:[#allocation9 + $0xe4] sm:$0xf]
      %v607 = vld [vmem:[#allocation9 + $0xe8] sm:$0xf]
      %v608 = vld [vmem:[#allocation9 + $0xec] sm:$0xf]
      %v609 = vld [vmem:[#allocation9 + $0xf0] sm:$0xf]
      %v610 = vld [vmem:[#allocation9 + $0xf4] sm:$0xf]
      %v611 = vld [vmem:[#allocation9 + $0xf8] sm:$0xf]
      %v612 = vld [vmem:[#allocation9 + $0xfc] sm:$0xf]
      %v613 = vld [vmem:[#allocation9 + $0x100] sm:$0xf]
      %v614 = vld [vmem:[#allocation9 + $0x104] sm:$0xf]
      %v615 = vld [vmem:[#allocation9 + $0x108] sm:$0xf]
      %v616 = vld [vmem:[#allocation9 + $0x10c] sm:$0xf]
      %v617 = vld [vmem:[#allocation9 + $0x110] sm:$0xf]
      %v618 = vld [vmem:[#allocation9 + $0x114] sm:$0xf]
      %v619 = vld [vmem:[#allocation9 + $0x118] sm:$0xf]
      %v620 = vld [vmem:[#allocation9 + $0x11c] sm:$0xf]
      %v621 = vld [vmem:[#allocation9 + $0x120] sm:$0xf]
      %v622 = vld [vmem:[#allocation9 + $0x124] sm:$0xf]
      %v623 = vld [vmem:[#allocation9 + $0x128] sm:$0xf]
      %v624 = vld [vmem:[#allocation9 + $0x12c] sm:$0xf]
      %v625 = vld [vmem:[#allocation9 + $0x130] sm:$0xf]
      %v626 = vld [vmem:[#allocation9 + $0x134] sm:$0xf]
      %v627 = vld [vmem:[#allocation9 + $0x138] sm:$0xf]
      %v628 = vld [vmem:[#allocation9 + $0x13c] sm:$0xf]
      %v629 = vld [vmem:[#allocation9 + $0x140] sm:$0xf]
      %v630 = vld [vmem:[#allocation9 + $0x144] sm:$0xf]
      %v631 = vld [vmem:[#allocation9 + $0x148] sm:$0xf]
      %v632 = vld [vmem:[#allocation9 + $0x14c] sm:$0xf]
      %v633 = vld [vmem:[#allocation9 + $0x150] sm:$0xf]
      %v634 = vld [vmem:[#allocation9 + $0x154] sm:$0xf]
      %v635 = vld [vmem:[#allocation9 + $0x158] sm:$0xf]
      %v636 = vld [vmem:[#allocation9 + $0x15c] sm:$0xf]
      %v637 = vld [vmem:[#allocation9 + $0x160] sm:$0xf]
      %v638 = vld [vmem:[#allocation9 + $0x164] sm:$0xf]
      %v639 = vld [vmem:[#allocation9 + $0x168] sm:$0xf]
      %v640 = vld [vmem:[#allocation9 + $0x16c] sm:$0xf]
      %v641 = vld [vmem:[#allocation9 + $0x170] sm:$0xf]
      %v642 = vld [vmem:[#allocation9 + $0x174] sm:$0xf]
      %v643 = vld [vmem:[#allocation9 + $0x178] sm:$0xf]
      %v644 = vld [vmem:[#allocation9 + $0x17c] sm:$0xf]
      %v645 = vld [vmem:[#allocation9 + $0x180] sm:$0xf]
      %v646 = vld [vmem:[#allocation9 + $0x184] sm:$0xf]
      %v647 = vld [vmem:[#allocation9 + $0x188] sm:$0xf]
      %v648 = vld [vmem:[#allocation9 + $0x18c] sm:$0xf]
      %v649 = vld [vmem:[#allocation9 + $0x190] sm:$0xf]
      %v650 = vld [vmem:[#allocation9 + $0x194] sm:$0xf]
      %v651 = vld [vmem:[#allocation9 + $0x198] sm:$0xf]
      %v652 = vld [vmem:[#allocation9 + $0x19c] sm:$0xf]
      %v653 = vld [vmem:[#allocation9 + $0x1a0] sm:$0xf]
      %v654 = vld [vmem:[#allocation9 + $0x1a4] sm:$0xf]
      %v655 = vld [vmem:[#allocation9 + $0x1a8] sm:$0xf]
      %v656 = vld [vmem:[#allocation9 + $0x1ac] sm:$0xf]
      %v657 = vld [vmem:[#allocation9 + $0x1b0] sm:$0xf]
      %v658 = vld [vmem:[#allocation9 + $0x1b4] sm:$0xf]
      %v659 = vld [vmem:[#allocation9 + $0x1b8] sm:$0xf]
      %v660 = vld [vmem:[#allocation9 + $0x1bc] sm:$0xf]
      %v661 = vld [vmem:[#allocation9 + $0x1c0] sm:$0xf]
      %v662 = vld [vmem:[#allocation9 + $0x1c4] sm:$0xf]
      %v663 = vld [vmem:[#allocation9 + $0x1c8] sm:$0xf]
      %v664 = vld [vmem:[#allocation9 + $0x1cc] sm:$0xf]
      %v665 = vld [vmem:[#allocation9 + $0x1d0] sm:$0xf]
      %v666 = vld [vmem:[#allocation9 + $0x1d4] sm:$0xf]
      %v667 = vld [vmem:[#allocation9 + $0x1d8] sm:$0xf]
      %v668 = vld [vmem:[#allocation9 + $0x1dc] sm:$0xf]
      %v669 = vld [vmem:[#allocation9 + $0x1e0] sm:$0xf]
      %v670 = vld [vmem:[#allocation9 + $0x1e4] sm:$0xf]
      %v671 = vld [vmem:[#allocation9 + $0x1e8] sm:$0xf]
      %v672 = vld [vmem:[#allocation9 + $0x1ec] sm:$0xf]
      %v673 = vld [vmem:[#allocation9 + $0x1f0] sm:$0xf]
      %v674 = vld [vmem:[#allocation9 + $0x1f4] sm:$0xf]
      %v675 = vld [vmem:[#allocation9 + $0x1f8] sm:$0xf]
      %v676 = vld [vmem:[#allocation9 + $0x1fc] sm:$0xf]
      %v677 = vld [vmem:[%s4] sm:$0x1]
      %v679 = vlaneseq
      %v680 = vshrl.u32 %v679, 7
      %v681 = vsub.s32 0, %v680
      %v682 = vrot.slane %v677, %v681
      %v812 = vunpack.c.l.b16 %v549
      %v813 = vunpack.c.l.b16 %v550
      %v814 = vunpack.c.l.b16 %v551
      %v815 = vunpack.c.l.b16 %v552
      %v816 = vunpack.c.l.b16 %v553
      %v817 = vunpack.c.l.b16 %v554
      %v818 = vunpack.c.l.b16 %v555
      %v819 = vunpack.c.l.b16 %v556
      %v820 = vunpack.c.l.b16 %v557
      %v821 = vunpack.c.l.b16 %v558
      %v822 = vunpack.c.l.b16 %v559
      %v823 = vunpack.c.l.b16 %v560
      %v824 = vunpack.c.l.b16 %v561
      %v825 = vunpack.c.l.b16 %v562
      %v826 = vunpack.c.l.b16 %v563
      %v827 = vunpack.c.l.b16 %v564
      %v828 = vunpack.c.l.b16 %v565
      %v829 = vunpack.c.l.b16 %v566
      %v830 = vunpack.c.l.b16 %v567
      %v831 = vunpack.c.l.b16 %v568
      %v832 = vunpack.c.l.b16 %v569
      %v833 = vunpack.c.l.b16 %v570
      %v834 = vunpack.c.l.b16 %v571
      %v835 = vunpack.c.l.b16 %v572
      %v836 = vunpack.c.l.b16 %v573
      %v837 = vunpack.c.l.b16 %v574
      %v838 = vunpack.c.l.b16 %v575
      %v839 = vunpack.c.l.b16 %v576
      %v840 = vunpack.c.l.b16 %v577
      %v841 = vunpack.c.l.b16 %v578
      %v842 = vunpack.c.l.b16 %v579
      %v843 = vunpack.c.l.b16 %v580
      %v844 = vunpack.c.l.b16 %v581
      %v845 = vunpack.c.l.b16 %v582
      %v846 = vunpack.c.l.b16 %v583
      %v847 = vunpack.c.l.b16 %v584
      %v848 = vunpack.c.l.b16 %v585
      %v849 = vunpack.c.l.b16 %v586
      %v850 = vunpack.c.l.b16 %v587
      %v851 = vunpack.c.l.b16 %v588
      %v852 = vunpack.c.l.b16 %v589
      %v853 = vunpack.c.l.b16 %v590
      %v854 = vunpack.c.l.b16 %v591
      %v855 = vunpack.c.l.b16 %v592
      %v856 = vunpack.c.l.b16 %v593
      %v857 = vunpack.c.l.b16 %v594
      %v858 = vunpack.c.l.b16 %v595
      %v859 = vunpack.c.l.b16 %v596
      %v860 = vunpack.c.l.b16 %v597
      %v861 = vunpack.c.l.b16 %v598
      %v862 = vunpack.c.l.b16 %v599
      %v863 = vunpack.c.l.b16 %v600
      %v864 = vunpack.c.l.b16 %v601
      %v865 = vunpack.c.l.b16 %v602
      %v866 = vunpack.c.l.b16 %v603
      %v867 = vunpack.c.l.b16 %v604
      %v868 = vunpack.c.l.b16 %v605
      %v869 = vunpack.c.l.b16 %v606
      %v870 = vunpack.c.l.b16 %v607
      %v871 = vunpack.c.l.b16 %v608
      %v872 = vunpack.c.l.b16 %v609
      %v873 = vunpack.c.l.b16 %v610
      %v874 = vunpack.c.l.b16 %v611
      %v875 = vunpack.c.l.b16 %v612
      %v876 = vunpack.c.l.b16 %v613
      %v877 = vunpack.c.l.b16 %v614
      %v878 = vunpack.c.l.b16 %v615
      %v879 = vunpack.c.l.b16 %v616
      %v880 = vunpack.c.l.b16 %v617
      %v881 = vunpack.c.l.b16 %v618
      %v882 = vunpack.c.l.b16 %v619
      %v883 = vunpack.c.l.b16 %v620
      %v884 = vunpack.c.l.b16 %v621
      %v885 = vunpack.c.l.b16 %v622
      %v886 = vunpack.c.l.b16 %v623
      %v887 = vunpack.c.l.b16 %v624
      %v888 = vunpack.c.l.b16 %v625
      %v889 = vunpack.c.l.b16 %v626
      %v890 = vunpack.c.l.b16 %v627
      %v891 = vunpack.c.l.b16 %v628
      %v892 = vunpack.c.l.b16 %v629
      %v893 = vunpack.c.l.b16 %v630
      %v894 = vunpack.c.l.b16 %v631
      %v895 = vunpack.c.l.b16 %v632
      %v896 = vunpack.c.l.b16 %v633
      %v897 = vunpack.c.l.b16 %v634
      %v898 = vunpack.c.l.b16 %v635
      %v899 = vunpack.c.l.b16 %v636
      %v900 = vunpack.c.l.b16 %v637
      %v901 = vunpack.c.l.b16 %v638
      %v902 = vunpack.c.l.b16 %v639
      %v903 = vunpack.c.l.b16 %v640
      %v904 = vunpack.c.l.b16 %v641
      %v905 = vunpack.c.l.b16 %v642
      %v906 = vunpack.c.l.b16 %v643
      %v907 = vunpack.c.l.b16 %v644
      %v908 = vunpack.c.l.b16 %v645
      %v909 = vunpack.c.l.b16 %v646
      %v910 = vunpack.c.l.b16 %v647
      %v911 = vunpack.c.l.b16 %v648
      %v912 = vunpack.c.l.b16 %v649
      %v913 = vunpack.c.l.b16 %v650
      %v914 = vunpack.c.l.b16 %v651
      %v915 = vunpack.c.l.b16 %v652
      %v916 = vunpack.c.l.b16 %v653
      %v917 = vunpack.c.l.b16 %v654
      %v918 = vunpack.c.l.b16 %v655
      %v919 = vunpack.c.l.b16 %v656
      %v920 = vunpack.c.l.b16 %v657
      %v921 = vunpack.c.l.b16 %v658
      %v922 = vunpack.c.l.b16 %v659
      %v923 = vunpack.c.l.b16 %v660
      %v924 = vunpack.c.l.b16 %v661
      %v925 = vunpack.c.l.b16 %v662
      %v926 = vunpack.c.l.b16 %v663
      %v927 = vunpack.c.l.b16 %v664
      %v928 = vunpack.c.l.b16 %v665
      %v929 = vunpack.c.l.b16 %v666
      %v930 = vunpack.c.l.b16 %v667
      %v931 = vunpack.c.l.b16 %v668
      %v932 = vunpack.c.l.b16 %v669
      %v933 = vunpack.c.l.b16 %v670
      %v934 = vunpack.c.l.b16 %v671
      %v935 = vunpack.c.l.b16 %v672
      %v936 = vunpack.c.l.b16 %v673
      %v937 = vunpack.c.l.b16 %v674
      %v938 = vunpack.c.l.b16 %v675
      %v939 = vunpack.c.l.b16 %v676
      %v940 = vpack.c.b16 %v813, %v812
      %v941 = vpack.c.b16 %v815, %v814
      %v942 = vpack.c.b16 %v817, %v816
      %v943 = vpack.c.b16 %v819, %v818
      %v944 = vpack.c.b16 %v821, %v820
      %v945 = vpack.c.b16 %v823, %v822
      %v946 = vpack.c.b16 %v825, %v824
      %v947 = vpack.c.b16 %v827, %v826
      %v948 = vpack.c.b16 %v829, %v828
      %v949 = vpack.c.b16 %v831, %v830
      %v950 = vpack.c.b16 %v833, %v832
      %v951 = vpack.c.b16 %v835, %v834
      %v952 = vpack.c.b16 %v837, %v836
      %v953 = vpack.c.b16 %v839, %v838
      %v954 = vpack.c.b16 %v841, %v840
      %v955 = vpack.c.b16 %v843, %v842
      %v956 = vpack.c.b16 %v845, %v844
      %v957 = vpack.c.b16 %v847, %v846
      %v958 = vpack.c.b16 %v849, %v848
      %v959 = vpack.c.b16 %v851, %v850
      %v960 = vpack.c.b16 %v853, %v852
      %v961 = vpack.c.b16 %v855, %v854
      %v962 = vpack.c.b16 %v857, %v856
      %v963 = vpack.c.b16 %v859, %v858
      %v964 = vpack.c.b16 %v861, %v860
      %v965 = vpack.c.b16 %v863, %v862
      %v966 = vpack.c.b16 %v865, %v864
      %v967 = vpack.c.b16 %v867, %v866
      %v968 = vpack.c.b16 %v869, %v868
      %v969 = vpack.c.b16 %v871, %v870
      %v970 = vpack.c.b16 %v873, %v872
      %v971 = vpack.c.b16 %v875, %v874
      %v972 = vpack.c.b16 %v877, %v876
      %v973 = vpack.c.b16 %v879, %v878
      %v974 = vpack.c.b16 %v881, %v880
      %v975 = vpack.c.b16 %v883, %v882
      %v976 = vpack.c.b16 %v885, %v884
      %v977 = vpack.c.b16 %v887, %v886
      %v978 = vpack.c.b16 %v889, %v888
      %v979 = vpack.c.b16 %v891, %v890
      %v980 = vpack.c.b16 %v893, %v892
      %v981 = vpack.c.b16 %v895, %v894
      %v982 = vpack.c.b16 %v897, %v896
      %v983 = vpack.c.b16 %v899, %v898
      %v984 = vpack.c.b16 %v901, %v900
      %v985 = vpack.c.b16 %v903, %v902
      %v986 = vpack.c.b16 %v905, %v904
      %v987 = vpack.c.b16 %v907, %v906
      %v988 = vpack.c.b16 %v909, %v908
      %v989 = vpack.c.b16 %v911, %v910
      %v990 = vpack.c.b16 %v913, %v912
      %v991 = vpack.c.b16 %v915, %v914
      %v992 = vpack.c.b16 %v917, %v916
      %v993 = vpack.c.b16 %v919, %v918
      %v994 = vpack.c.b16 %v921, %v920
      %v995 = vpack.c.b16 %v923, %v922
      %v996 = vpack.c.b16 %v925, %v924
      %v997 = vpack.c.b16 %v927, %v926
      %v998 = vpack.c.b16 %v929, %v928
      %v999 = vpack.c.b16 %v931, %v930
      %v1000 = vpack.c.b16 %v933, %v932
      %v1001 = vpack.c.b16 %v935, %v934
      %v1002 = vpack.c.b16 %v937, %v936
      %v1003 = vpack.c.b16 %v939, %v938
      %1068 = vmatprep.subr.bf16.mxu0 0
      %1069 = vmatpush1.bf16.msra.mxu0 %v940
      %1070 = vmatprep.subr.bf16.mxu0 0
      %1071 = vmatpush1.bf16.msra.mxu0 %v941
      %1072 = vmatprep.subr.bf16.mxu0 0
      %1073 = vmatpush1.bf16.msra.mxu0 %v942
      %1074 = vmatprep.subr.bf16.mxu0 0
      %1075 = vmatpush1.bf16.msra.mxu0 %v943
      %1076 = vmatprep.subr.bf16.mxu0 0
      %1077 = vmatpush1.bf16.msra.mxu0 %v944
      %1078 = vmatprep.subr.bf16.mxu0 0
      %1079 = vmatpush1.bf16.msra.mxu0 %v945
      %1080 = vmatprep.subr.bf16.mxu0 0
      %1081 = vmatpush1.bf16.msra.mxu0 %v946
      %1082 = vmatprep.subr.bf16.mxu0 0
      %1083 = vmatpush1.bf16.msra.mxu0 %v947
      %1084 = vmatprep.subr.bf16.mxu0 0
      %1085 = vmatpush1.bf16.msra.mxu0 %v948
      %1086 = vmatprep.subr.bf16.mxu0 0
      %1087 = vmatpush1.bf16.msra.mxu0 %v949
      %1088 = vmatprep.subr.bf16.mxu0 0
      %1089 = vmatpush1.bf16.msra.mxu0 %v950
      %1090 = vmatprep.subr.bf16.mxu0 0
      %1091 = vmatpush1.bf16.msra.mxu0 %v951
      %1092 = vmatprep.subr.bf16.mxu0 0
      %1093 = vmatpush1.bf16.msra.mxu0 %v952
      %1094 = vmatprep.subr.bf16.mxu0 0
      %1095 = vmatpush1.bf16.msra.mxu0 %v953
      %1096 = vmatprep.subr.bf16.mxu0 0
      %1097 = vmatpush1.bf16.msra.mxu0 %v954
      %1098 = vmatprep.subr.bf16.mxu0 0
      %1099 = vmatpush1.bf16.msra.mxu0 %v955
      %1100 = vmatprep.mubr.bf16.mxu0 %v542
      %1101 = vmatmul.mubr.bf16.gmra.mrb[0].mxu0 %v541
      %v1102 = vpop.f32.mrb[0].mxu0
      %v1103 = vadd.f32 %v682, %v1102
      %v1104 = vpop.f32.mrb[0].mxu0
      %v1105 = vpop.f32.mrb[0].mxu0
      %v1106 = vpop.f32.mrb[0].mxu0
      %1107 = vdwg.mxu0
      %1108 = vmatprep.subr.bf16.mxu0 0
      %1109 = vmatpush1.bf16.msra.mxu0 %v956
      %1110 = vmatprep.subr.bf16.mxu0 0
      %1111 = vmatpush1.bf16.msra.mxu0 %v957
      %1112 = vmatprep.subr.bf16.mxu0 0
      %1113 = vmatpush1.bf16.msra.mxu0 %v958
      %1114 = vmatprep.subr.bf16.mxu0 0
      %1115 = vmatpush1.bf16.msra.mxu0 %v959
      %1116 = vmatprep.subr.bf16.mxu0 0
      %1117 = vmatpush1.bf16.msra.mxu0 %v960
      %1118 = vmatprep.subr.bf16.mxu0 0
      %1119 = vmatpush1.bf16.msra.mxu0 %v961
      %1120 = vmatprep.subr.bf16.mxu0 0
      %1121 = vmatpush1.bf16.msra.mxu0 %v962
      %1122 = vmatprep.subr.bf16.mxu0 0
      %1123 = vmatpush1.bf16.msra.mxu0 %v963
      %1124 = vmatprep.subr.bf16.mxu0 0
      %1125 = vmatpush1.bf16.msra.mxu0 %v964
      %1126 = vmatprep.subr.bf16.mxu0 0
      %1127 = vmatpush1.bf16.msra.mxu0 %v965
      %1128 = vmatprep.subr.bf16.mxu0 0
      %1129 = vmatpush1.bf16.msra.mxu0 %v966
      %1130 = vmatprep.subr.bf16.mxu0 0
      %1131 = vmatpush1.bf16.msra.mxu0 %v967
      %1132 = vmatprep.subr.bf16.mxu0 0
      %1133 = vmatpush1.bf16.msra.mxu0 %v968
      %1134 = vmatprep.subr.bf16.mxu0 0
      %1135 = vmatpush1.bf16.msra.mxu0 %v969
      %1136 = vmatprep.subr.bf16.mxu0 0
      %1137 = vmatpush1.bf16.msra.mxu0 %v970
      %1138 = vmatprep.subr.bf16.mxu0 0
      %1139 = vmatpush1.bf16.msra.mxu0 %v971
      %1140 = vmatprep.mubr.bf16.mxu0 %v544
      %1141 = vmatmul.mubr.bf16.gmra.mrb[0].mxu0 %v543
      %v1142 = vpop.f32.mrb[0].mxu0
      %v1143 = vadd.f32 %v1103, %v1142
      %v1144 = vpop.f32.mrb[0].mxu0
      %v1145 = vpop.f32.mrb[0].mxu0
      %v1146 = vpop.f32.mrb[0].mxu0
      %1147 = vdwg.mxu0
      %1148 = vmatprep.subr.bf16.mxu0 0
      %1149 = vmatpush1.bf16.msra.mxu0 %v972
      %1150 = vmatprep.subr.bf16.mxu0 0
      %1151 = vmatpush1.bf16.msra.mxu0 %v973
      %1152 = vmatprep.subr.bf16.mxu0 0
      %1153 = vmatpush1.bf16.msra.mxu0 %v974
      %1154 = vmatprep.subr.bf16.mxu0 0
      %1155 = vmatpush1.bf16.msra.mxu0 %v975
      %1156 = vmatprep.subr.bf16.mxu0 0
      %1157 = vmatpush1.bf16.msra.mxu0 %v976
      %1158 = vmatprep.subr.bf16.mxu0 0
      %1159 = vmatpush1.bf16.msra.mxu0 %v977
      %1160 = vmatprep.subr.bf16.mxu0 0
      %1161 = vmatpush1.bf16.msra.mxu0 %v978
      %1162 = vmatprep.subr.bf16.mxu0 0
      %1163 = vmatpush1.bf16.msra.mxu0 %v979
      %1164 = vmatprep.subr.bf16.mxu0 0
      %1165 = vmatpush1.bf16.msra.mxu0 %v980
      %1166 = vmatprep.subr.bf16.mxu0 0
      %1167 = vmatpush1.bf16.msra.mxu0 %v981
      %1168 = vmatprep.subr.bf16.mxu0 0
      %1169 = vmatpush1.bf16.msra.mxu0 %v982
      %1170 = vmatprep.subr.bf16.mxu0 0
      %1171 = vmatpush1.bf16.msra.mxu0 %v983
      %1172 = vmatprep.subr.bf16.mxu0 0
      %1173 = vmatpush1.bf16.msra.mxu0 %v984
      %1174 = vmatprep.subr.bf16.mxu0 0
      %1175 = vmatpush1.bf16.msra.mxu0 %v985
      %1176 = vmatprep.subr.bf16.mxu0 0
      %1177 = vmatpush1.bf16.msra.mxu0 %v986
      %1178 = vmatprep.subr.bf16.mxu0 0
      %1179 = vmatpush1.bf16.msra.mxu0 %v987
      %1180 = vmatprep.mubr.bf16.mxu0 %v546
      %1181 = vmatmul.mubr.bf16.gmra.mrb[0].mxu0 %v545
      %v1182 = vpop.f32.mrb[0].mxu0
      %v1183 = vadd.f32 %v1143, %v1182
      %v1184 = vpop.f32.mrb[0].mxu0
      %v1185 = vpop.f32.mrb[0].mxu0
      %v1186 = vpop.f32.mrb[0].mxu0
      %1187 = vdwg.mxu0
      %1188 = vmatprep.subr.bf16.mxu0 0
      %1189 = vmatpush1.bf16.msra.mxu0 %v988
      %1190 = vmatprep.subr.bf16.mxu0 0
      %1191 = vmatpush1.bf16.msra.mxu0 %v989
      %1192 = vmatprep.subr.bf16.mxu0 0
      %1193 = vmatpush1.bf16.msra.mxu0 %v990
      %1194 = vmatprep.subr.bf16.mxu0 0
      %1195 = vmatpush1.bf16.msra.mxu0 %v991
      %1196 = vmatprep.subr.bf16.mxu0 0
      %1197 = vmatpush1.bf16.msra.mxu0 %v992
      %1198 = vmatprep.subr.bf16.mxu0 0
      %1199 = vmatpush1.bf16.msra.mxu0 %v993
      %1200 = vmatprep.subr.bf16.mxu0 0
      %1201 = vmatpush1.bf16.msra.mxu0 %v994
      %1202 = vmatprep.subr.bf16.mxu0 0
      %1203 = vmatpush1.bf16.msra.mxu0 %v995
      %1204 = vmatprep.subr.bf16.mxu0 0
      %1205 = vmatpush1.bf16.msra.mxu0 %v996
      %1206 = vmatprep.subr.bf16.mxu0 0
      %1207 = vmatpush1.bf16.msra.mxu0 %v997
      %1208 = vmatprep.subr.bf16.mxu0 0
      %1209 = vmatpush1.bf16.msra.mxu0 %v998
      %1210 = vmatprep.subr.bf16.mxu0 0
      %1211 = vmatpush1.bf16.msra.mxu0 %v999
      %1212 = vmatprep.subr.bf16.mxu0 0
      %1213 = vmatpush1.bf16.msra.mxu0 %v1000
      %1214 = vmatprep.subr.bf16.mxu0 0
      %1215 = vmatpush1.bf16.msra.mxu0 %v1001
      %1216 = vmatprep.subr.bf16.mxu0 0
      %1217 = vmatpush1.bf16.msra.mxu0 %v1002
      %1218 = vmatprep.subr.bf16.mxu0 0
      %1219 = vmatpush1.bf16.msra.mxu0 %v1003
      %1220 = vmatprep.mubr.bf16.mxu0 %v548
      %1221 = vmatmul.mubr.bf16.gmra.mrb[0].mxu0 %v547
      %v1222 = vpop.f32.mrb[0].mxu0
      %v1223 = vadd.f32 %v1183, %v1222
      %v1224 = vpop.f32.mrb[0].mxu0
      %v1225 = vpop.f32.mrb[0].mxu0
      %v1226 = vpop.f32.mrb[0].mxu0
      %1227 = vdwg.mxu0
      %1228 = vst [vmem:[#allocation11] sm:$0xff] %v1223
    $region45: #{tpu_custom_call.1} parent=1 // pred_fallthru
      _
    // Predicated region
    $region46: #{tpu_custom_call.1} parent=1 // pred_check
      _
    $region47: #{tpu_custom_call.1} parent=1 // pred_check_branch
      %1230 = sbr.rel (0) target = $region49
    $region48: #{tpu_custom_call.1} parent=1 // pred_region
      %s1232 = ssub.s32 128, 128
      %1233 = vsyncadd [#allocation5], %s1232
      %s1235 = sshll.u32 [#allocation11], 4
      %s1236 = int_to_ptr.vmem [resolvable:$true] %s1235
      %1238 = dma.vmem_to_hbm [thread:$0]  %s1236, 128, %s5, [#allocation5]
    $region49: #{tpu_custom_call.1} parent=1 // pred_fallthru
      _
    // Predicated region
    $region50: #{tpu_custom_call.1} parent=1 // pred_check
      _
    $region51: #{tpu_custom_call.1} parent=1 // pred_check_branch
      %1240 = sbr.rel (0) target = $region53
    $region52: #{tpu_custom_call.1} parent=1 // pred_region
      %1241 = dma.done [#allocation5], 128
    $region53: #{tpu_custom_call.1} parent=1 // pred_fallthru
      _
    %1242 = vsyncpa [#allocation4], 1
    %1243 = vsyncpa [#allocation7], 1
    %1244 = vsyncpa [#allocation10], 1
    %1245 = vsyncpa [#allocation5], 1

</llo_original>
